<compile_context>
chip_gen: v5e
topology: v5e:2x2
jax: 0.10.0
libtpu: 0.0.40
codegen_flags: <defaults>
</compile_context>

<pallas_src>
import jax
import jax.numpy as jnp
from jax.experimental import pallas as pl
from jax.experimental.pallas import tpu as pltpu


# ----------------------------- Pallas kernel --------------------------------

def _light_pan_kernel(x1_ref, x2_ref, x3_ref,
                      w1_ref, b1_ref, w2_ref, b2_ref, w3_ref, b3_ref,
                      v21_ref, v32_ref,
                      p1_ref, p2_ref, p3_ref):
    """One batch element per grid step.

    x{i}_ref : (1, Cin_i, HW_i)     activation, channels on sublane, spatial on lane
    w{i}_ref : (Cout, Cin_i)        1x1 conv weight as a matmul matrix
    b{i}_ref : (Cout, 1)            bias (broadcast over lanes)
    v21_ref  : (HW_2, HW_1)         0/1 nearest-upsample replication matrix (level 2 -> 1)
    v32_ref  : (HW_3, HW_2)         0/1 nearest-upsample replication matrix (level 3 -> 2)
    p{i}_ref : (1, Cout, HW_i)      outputs
    """
    f32 = jnp.float32

    x1 = x1_ref[0]          # (C1, HW1)
    x2 = x2_ref[0]          # (C2, HW2)
    x3 = x3_ref[0]          # (C3, HW3)

    # p3 = conv3(x3)
    p3 = jnp.dot(w3_ref[...], x3, preferred_element_type=f32) + b3_ref[...]
    p3_ref[0] = p3.astype(p3_ref.dtype)

    # p2 = conv2(x2) + upsample(p3)        (upsample == matmul with 0/1 matrix)
    r2 = jnp.dot(p3, v32_ref[...], preferred_element_type=f32)          # (Cout, HW2)
    p2 = jnp.dot(w2_ref[...], x2, preferred_element_type=f32) + b2_ref[...] + r2
    p2_ref[0] = p2.astype(p2_ref.dtype)

    # p1 = conv1(x1) + upsample(p2)
    r1 = jnp.dot(p2, v21_ref[...], preferred_element_type=f32)          # (Cout, HW1)
    p1 = jnp.dot(w1_ref[...], x1, preferred_element_type=f32) + b1_ref[...] + r1
    p1_ref[0] = p1.astype(p1_ref.dtype)


# ----------------------------- Host wrapper ---------------------------------

def _upsample_matrix(hc, wc, dtype):
    """0/1 matrix V of shape (hc*wc, 2*hc*2*wc) with V[c, f] = 1 iff coarse
    pixel c is the nearest-neighbour source of fine pixel f (PyTorch
    nn.Upsample(scale_factor=2, mode='nearest') semantics: src = dst // 2)."""
    hf, wf = 2 * hc, 2 * wc
    h_src = jnp.arange(hf) // 2                      # (hf,)
    w_src = jnp.arange(wf) // 2                      # (wf,)
    coarse_of_fine = (h_src[:, None] * wc + w_src[None, :]).reshape(-1)   # (hf*wf,)
    return (jnp.arange(hc * wc)[:, None] == coarse_of_fine[None, :]).astype(dtype)


@jax.jit
def light_pan_forward(x1, x2, x3, params):
    """Inputs/outputs are NCHW (PyTorch convention). Returns (p1, p2, p3)."""
    n, c1, h1, w1 = x1.shape
    _, c2, h2, w2 = x2.shape
    _, c3, h3, w3 = x3.shape
    cout = params["w1"].shape[0]
    hw1, hw2, hw3 = h1 * w1, h2 * w2, h3 * w3
    dt = x1.dtype

    # Free contiguous reshapes: NCHW -> (N, C, H*W)
    x1f = x1.reshape(n, c1, hw1)
    x2f = x2.reshape(n, c2, hw2)
    x3f = x3.reshape(n, c3, hw3)

    # Nearest-2x upsample as replication matmuls (constant-folded by XLA).
    v32 = _upsample_matrix(h3, w3, dt)               # (hw3, hw2)
    v21 = _upsample_matrix(h2, w2, dt)               # (hw2, hw1)

    def batched(shape):        # per-batch 3-D block
        return pl.BlockSpec((1,) + shape, lambda b: (b, 0, 0))

    def shared(shape):         # parameters shared across grid steps
        return pl.BlockSpec(shape, lambda b: (0, 0))

    flops = 2 * n * cout * (hw1 * c1 + hw2 * c2 + hw3 * c3 + hw3 * hw2 + hw2 * hw1)
    elem = 4  # f32 bytes
    bytes_accessed = elem * (
        n * (c1 * hw1 + c2 * hw2 + c3 * hw3)                         # activations in
        + cout * (c1 + c2 + c3) + 3 * cout                           # weights + biases
        + hw3 * hw2 + hw2 * hw1                                      # replication mats
        + n * cout * (hw1 + hw2 + hw3)                               # outputs
    )

    p1, p2, p3 = pl.pallas_call(
        _light_pan_kernel,
        out_shape=(
            jax.ShapeDtypeStruct((n, cout, hw1), dt),
            jax.ShapeDtypeStruct((n, cout, hw2), dt),
            jax.ShapeDtypeStruct((n, cout, hw3), dt),
        ),
        grid=(n,),
        in_specs=[
            batched((c1, hw1)), batched((c2, hw2)), batched((c3, hw3)),
            shared((cout, c1)), shared((cout, 1)),
            shared((cout, c2)), shared((cout, 1)),
            shared((cout, c3)), shared((cout, 1)),
            shared((hw2, hw1)), shared((hw3, hw2)),
        ],
        out_specs=[batched((cout, hw1)), batched((cout, hw2)), batched((cout, hw3))],
        compiler_params=pltpu.CompilerParams(dimension_semantics=("parallel",)),
        cost_estimate=pl.CostEstimate(
            flops=flops, transcendentals=0, bytes_accessed=bytes_accessed),
    )(x1f, x2f, x3f,
      params["w1"], params["b1"],
      params["w2"], params["b2"],
      params["w3"], params["b3"],
      v21, v32)

    return (p1.reshape(n, cout, h1, w1),
            p2.reshape(n, cout, h2, w2),
            p3.reshape(n, cout, h3, w3))


# ----------------------------- Reference (pure JAX) --------------------------

def _ref_forward(x1, x2, x3, params):
    def conv(x_nchw, w, b):  # w: (Cout, Cin), b: (Cout, 1)
        y = jnp.einsum("oc,nchw->nohw", w, x_nchw)
        return y + b[:, 0][None, :, None, None]

    up = lambda t: jnp.repeat(jnp.repeat(t, 2, axis=2), 2, axis=3)
    p3 = conv(x3, params["w3"], params["b3"])
    p2 = conv(x2, params["w2"], params["b2"]) + up(p3)
    p1 = conv(x1, params["w1"], params["b1"]) + up(p2)
    return p1, p2, p3


# ----------------------------- Main ------------------------------------------

if __name__ == "__main__":
    key = jax.random.PRNGKey(0)
    ks = jax.random.split(key, 9)

    in_channels = [64, 128, 256]
    out_channels = 64

    # Feature pyramid (NCHW, PyTorch convention), small spatial sizes.
    x1 = jax.random.normal(ks[0], (2, in_channels[0], 16, 16), jnp.float32)
    x2 = jax.random.normal(ks[1], (2, in_channels[1], 8, 8), jnp.float32)
    x3 = jax.random.normal(ks[2], (2, in_channels[2], 4, 4), jnp.float32)

    # PyTorch Conv2d weight is (Cout, Cin, 1, 1); we store the equivalent
    # matmul weight (Cout, Cin) and bias (Cout, 1).
    def init_w(k, cin, cout):
        return jax.random.normal(k, (cout, cin), jnp.float32) * 0.05

    def init_b(k, cout):
        return jax.random.normal(k, (cout, 1), jnp.float32) * 0.05

    params = {
        "w1": init_w(ks[3], in_channels[0], out_channels),
        "b1": init_b(ks[4], out_channels),
        "w2": init_w(ks[5], in_channels[1], out_channels),
        "b2": init_b(ks[6], out_channels),
        "w3": init_w(ks[7], in_channels[2], out_channels),
        "b3": init_b(ks[8], out_channels),
    }

    p1, p2, p3 = light_pan_forward(x1, x2, x3, params)
    jax.block_until_ready((p1, p2, p3))

    # Correctness check against a pure-JAX reference of the PyTorch forward.
    r1, r2, r3 = _ref_forward(x1, x2, x3, params)
    assert p1.shape == (2, out_channels, 16, 16)
    assert p2.shape == (2, out_channels, 8, 8)
    assert p3.shape == (2, out_channels, 4, 4)
    for got, want in ((p1, r1), (p2, r2), (p3, r3)):
        assert jnp.allclose(got, want, atol=1e-4, rtol=1e-4)

    print("KERNEL_OK")
</pallas_src>

<mosaic_0001>
module attributes {stable_mosaic.version = 11 : i64} {
  func.func @_light_pan_kernel(%arg0: i32, %arg1: memref<1x64x256xf32, #tpu.memory_space<vmem>>, %arg2: memref<1x128x64xf32, #tpu.memory_space<vmem>>, %arg3: memref<1x256x16xf32, #tpu.memory_space<vmem>>, %arg4: memref<64x64xf32, #tpu.memory_space<vmem>>, %arg5: memref<64x1xf32, #tpu.memory_space<vmem>>, %arg6: memref<64x128xf32, #tpu.memory_space<vmem>>, %arg7: memref<64x1xf32, #tpu.memory_space<vmem>>, %arg8: memref<64x256xf32, #tpu.memory_space<vmem>>, %arg9: memref<64x1xf32, #tpu.memory_space<vmem>>, %arg10: memref<64x256xf32, #tpu.memory_space<vmem>>, %arg11: memref<16x64xf32, #tpu.memory_space<vmem>>, %arg12: memref<1x64x256xf32, #tpu.memory_space<vmem>>, %arg13: memref<1x64x64xf32, #tpu.memory_space<vmem>>, %arg14: memref<1x64x16xf32, #tpu.memory_space<vmem>>) attributes {dimension_semantics = [#tpu.dimension_semantics<parallel>], iteration_bounds = array<i64: 2>, scalar_prefetch = 0 : i64, scratch_operands = 0 : i64, tpu.core_type = #tpu.core_type<tc>, window_params = [{transform_indices = @transform_0, window_bounds = array<i64: 1, 64, 256>}, {transform_indices = @transform_1, window_bounds = array<i64: 1, 128, 64>}, {transform_indices = @transform_2, window_bounds = array<i64: 1, 256, 16>}, {pipeline_mode = #tpu.pipeline_mode<synchronous>, transform_indices = @transform_3, window_bounds = array<i64: 64, 64>}, {pipeline_mode = #tpu.pipeline_mode<synchronous>, transform_indices = @transform_4, window_bounds = array<i64: 64, 1>}, {pipeline_mode = #tpu.pipeline_mode<synchronous>, transform_indices = @transform_5, window_bounds = array<i64: 64, 128>}, {pipeline_mode = #tpu.pipeline_mode<synchronous>, transform_indices = @transform_6, window_bounds = array<i64: 64, 1>}, {pipeline_mode = #tpu.pipeline_mode<synchronous>, transform_indices = @transform_7, window_bounds = array<i64: 64, 256>}, {pipeline_mode = #tpu.pipeline_mode<synchronous>, transform_indices = @transform_8, window_bounds = array<i64: 64, 1>}, {pipeline_mode = #tpu.pipeline_mode<synchronous>, transform_indices = @transform_9, window_bounds = array<i64: 64, 256>}, {pipeline_mode = #tpu.pipeline_mode<synchronous>, transform_indices = @transform_10, window_bounds = array<i64: 16, 64>}, {transform_indices = @transform_11, window_bounds = array<i64: 1, 64, 256>}, {transform_indices = @transform_12, window_bounds = array<i64: 1, 64, 64>}, {transform_indices = @transform_13, window_bounds = array<i64: 1, 64, 16>}]} {
    %c0 = arith.constant 0 : index
    %c0_0 = arith.constant 0 : index
    %c0_1 = arith.constant 0 : index
    %0 = vector.load %arg1[%c0, %c0_0, %c0_1] : memref<1x64x256xf32, #tpu.memory_space<vmem>>, vector<1x64x256xf32>
    %1 = vector.shape_cast %0 : vector<1x64x256xf32> to vector<64x256xf32>
    %c0_2 = arith.constant 0 : index
    %c0_3 = arith.constant 0 : index
    %c0_4 = arith.constant 0 : index
    %2 = vector.load %arg2[%c0_2, %c0_3, %c0_4] : memref<1x128x64xf32, #tpu.memory_space<vmem>>, vector<1x128x64xf32>
    %3 = vector.shape_cast %2 : vector<1x128x64xf32> to vector<128x64xf32>
    %c0_5 = arith.constant 0 : index
    %c0_6 = arith.constant 0 : index
    %c0_7 = arith.constant 0 : index
    %4 = vector.load %arg3[%c0_5, %c0_6, %c0_7] : memref<1x256x16xf32, #tpu.memory_space<vmem>>, vector<1x256x16xf32>
    %5 = vector.shape_cast %4 : vector<1x256x16xf32> to vector<256x16xf32>
    %c0_8 = arith.constant 0 : index
    %c0_9 = arith.constant 0 : index
    %6 = vector.load %arg8[%c0_8, %c0_9] : memref<64x256xf32, #tpu.memory_space<vmem>>, vector<64x256xf32>
    %cst = arith.constant dense<0.000000e+00> : vector<64x16xf32>
    %7 = tpu.matmul %6, %5, %cst {dimension_numbers = #tpu.dot_dimension_numbers<[1], [0], [0], [1], [0, 0, 1, 1], [], []>} : vector<64x256xf32>, vector<256x16xf32>, vector<64x16xf32> -> vector<64x16xf32>
    %c0_10 = arith.constant 0 : index
    %c0_11 = arith.constant 0 : index
    %8 = vector.load %arg9[%c0_10, %c0_11] : memref<64x1xf32, #tpu.memory_space<vmem>>, vector<64x1xf32>
    %9 = vector.broadcast %8 : vector<64x1xf32> to vector<64x16xf32>
    %10 = arith.addf %7, %9 : vector<64x16xf32>
    %c0_12 = arith.constant 0 : index
    %c0_13 = arith.constant 0 : index
    %c0_14 = arith.constant 0 : index
    %11 = vector.load %arg14[%c0_12, %c0_13, %c0_14] : memref<1x64x16xf32, #tpu.memory_space<vmem>>, vector<1x64x16xf32>
    %12 = vector.shape_cast %11 : vector<1x64x16xf32> to vector<64x16xf32>
    %13 = vector.shape_cast %10 : vector<64x16xf32> to vector<1x64x16xf32>
    tpu.vector_store %arg14[%c0_12, %c0_13, %c0_14], %13 {strides = array<i32>} : memref<1x64x16xf32, #tpu.memory_space<vmem>>, vector<1x64x16xf32>,
    %c0_15 = arith.constant 0 : index
    %c0_16 = arith.constant 0 : index
    %14 = vector.load %arg11[%c0_15, %c0_16] : memref<16x64xf32, #tpu.memory_space<vmem>>, vector<16x64xf32>
    %cst_17 = arith.constant dense<0.000000e+00> : vector<64x64xf32>
    %15 = tpu.matmul %10, %14, %cst_17 {dimension_numbers = #tpu.dot_dimension_numbers<[1], [0], [0], [1], [0, 0, 1, 1], [], []>} : vector<64x16xf32>, vector<16x64xf32>, vector<64x64xf32> -> vector<64x64xf32>
    %c0_18 = arith.constant 0 : index
    %c0_19 = arith.constant 0 : index
    %16 = vector.load %arg6[%c0_18, %c0_19] : memref<64x128xf32, #tpu.memory_space<vmem>>, vector<64x128xf32>
    %cst_20 = arith.constant dense<0.000000e+00> : vector<64x64xf32>
    %17 = tpu.matmul %16, %3, %cst_20 {dimension_numbers = #tpu.dot_dimension_numbers<[1], [0], [0], [1], [0, 0, 1, 1], [], []>} : vector<64x128xf32>, vector<128x64xf32>, vector<64x64xf32> -> vector<64x64xf32>
    %c0_21 = arith.constant 0 : index
    %c0_22 = arith.constant 0 : index
    %18 = vector.load %arg7[%c0_21, %c0_22] : memref<64x1xf32, #tpu.memory_space<vmem>>, vector<64x1xf32>
    %19 = vector.broadcast %18 : vector<64x1xf32> to vector<64x64xf32>
    %20 = arith.addf %17, %19 : vector<64x64xf32>
    %21 = arith.addf %20, %15 : vector<64x64xf32>
    %c0_23 = arith.constant 0 : index
    %c0_24 = arith.constant 0 : index
    %c0_25 = arith.constant 0 : index
    %22 = vector.load %arg13[%c0_23, %c0_24, %c0_25] : memref<1x64x64xf32, #tpu.memory_space<vmem>>, vector<1x64x64xf32>
    %23 = vector.shape_cast %22 : vector<1x64x64xf32> to vector<64x64xf32>
    %24 = vector.shape_cast %21 : vector<64x64xf32> to vector<1x64x64xf32>
    tpu.vector_store %arg13[%c0_23, %c0_24, %c0_25], %24 {strides = array<i32>} : memref<1x64x64xf32, #tpu.memory_space<vmem>>, vector<1x64x64xf32>,
    %c0_26 = arith.constant 0 : index
    %c0_27 = arith.constant 0 : index
    %25 = vector.load %arg10[%c0_26, %c0_27] : memref<64x256xf32, #tpu.memory_space<vmem>>, vector<64x256xf32>
    %cst_28 = arith.constant dense<0.000000e+00> : vector<64x256xf32>
    %26 = tpu.matmul %21, %25, %cst_28 {dimension_numbers = #tpu.dot_dimension_numbers<[1], [0], [0], [1], [0, 0, 1, 1], [], []>} : vector<64x64xf32>, vector<64x256xf32>, vector<64x256xf32> -> vector<64x256xf32>
    %c0_29 = arith.constant 0 : index
    %c0_30 = arith.constant 0 : index
    %27 = vector.load %arg4[%c0_29, %c0_30] : memref<64x64xf32, #tpu.memory_space<vmem>>, vector<64x64xf32>
    %cst_31 = arith.constant dense<0.000000e+00> : vector<64x256xf32>
    %28 = tpu.matmul %27, %1, %cst_31 {dimension_numbers = #tpu.dot_dimension_numbers<[1], [0], [0], [1], [0, 0, 1, 1], [], []>} : vector<64x64xf32>, vector<64x256xf32>, vector<64x256xf32> -> vector<64x256xf32>
    %c0_32 = arith.constant 0 : index
    %c0_33 = arith.constant 0 : index
    %29 = vector.load %arg5[%c0_32, %c0_33] : memref<64x1xf32, #tpu.memory_space<vmem>>, vector<64x1xf32>
    %30 = vector.broadcast %29 : vector<64x1xf32> to vector<64x256xf32>
    %31 = arith.addf %28, %30 : vector<64x256xf32>
    %32 = arith.addf %31, %26 : vector<64x256xf32>
    %c0_34 = arith.constant 0 : index
    %c0_35 = arith.constant 0 : index
    %c0_36 = arith.constant 0 : index
    %33 = vector.load %arg12[%c0_34, %c0_35, %c0_36] : memref<1x64x256xf32, #tpu.memory_space<vmem>>, vector<1x64x256xf32>
    %34 = vector.shape_cast %33 : vector<1x64x256xf32> to vector<64x256xf32>
    %35 = vector.shape_cast %32 : vector<64x256xf32> to vector<1x64x256xf32>
    tpu.vector_store %arg12[%c0_34, %c0_35, %c0_36], %35 {strides = array<i32>} : memref<1x64x256xf32, #tpu.memory_space<vmem>>, vector<1x64x256xf32>,
    return
  }
  func.func @transform_0(%arg0: i32) -> (i32, i32, i32) {
    %c0_i32 = arith.constant 0 : i32
    %c0_i32_0 = arith.constant 0 : i32
    %c0_i32_1 = arith.constant 0 : i32
    return %arg0, %c0_i32, %c0_i32_0 : i32, i32, i32
  }
  func.func @transform_1(%arg0: i32) -> (i32, i32, i32) {
    %c0_i32 = arith.constant 0 : i32
    %c0_i32_0 = arith.constant 0 : i32
    %c0_i32_1 = arith.constant 0 : i32
    return %arg0, %c0_i32, %c0_i32_0 : i32, i32, i32
  }
  func.func @transform_2(%arg0: i32) -> (i32, i32, i32) {
    %c0_i32 = arith.constant 0 : i32
    %c0_i32_0 = arith.constant 0 : i32
    %c0_i32_1 = arith.constant 0 : i32
    return %arg0, %c0_i32, %c0_i32_0 : i32, i32, i32
  }
  func.func @transform_3(%arg0: i32) -> (i32, i32) {
    %c0_i32 = arith.constant 0 : i32
    %c0_i32_0 = arith.constant 0 : i32
    %c0_i32_1 = arith.constant 0 : i32
    return %c0_i32, %c0_i32_0 : i32, i32
  }
  func.func @transform_4(%arg0: i32) -> (i32, i32) {
    %c0_i32 = arith.constant 0 : i32
    %c0_i32_0 = arith.constant 0 : i32
    %c0_i32_1 = arith.constant 0 : i32
    return %c0_i32, %c0_i32_0 : i32, i32
  }
  func.func @transform_5(%arg0: i32) -> (i32, i32) {
    %c0_i32 = arith.constant 0 : i32
    %c0_i32_0 = arith.constant 0 : i32
    %c0_i32_1 = arith.constant 0 : i32
    return %c0_i32, %c0_i32_0 : i32, i32
  }
  func.func @transform_6(%arg0: i32) -> (i32, i32) {
    %c0_i32 = arith.constant 0 : i32
    %c0_i32_0 = arith.constant 0 : i32
    %c0_i32_1 = arith.constant 0 : i32
    return %c0_i32, %c0_i32_0 : i32, i32
  }
  func.func @transform_7(%arg0: i32) -> (i32, i32) {
    %c0_i32 = arith.constant 0 : i32
    %c0_i32_0 = arith.constant 0 : i32
    %c0_i32_1 = arith.constant 0 : i32
    return %c0_i32, %c0_i32_0 : i32, i32
  }
  func.func @transform_8(%arg0: i32) -> (i32, i32) {
    %c0_i32 = arith.constant 0 : i32
    %c0_i32_0 = arith.constant 0 : i32
    %c0_i32_1 = arith.constant 0 : i32
    return %c0_i32, %c0_i32_0 : i32, i32
  }
  func.func @transform_9(%arg0: i32) -> (i32, i32) {
    %c0_i32 = arith.constant 0 : i32
    %c0_i32_0 = arith.constant 0 : i32
    %c0_i32_1 = arith.constant 0 : i32
    return %c0_i32, %c0_i32_0 : i32, i32
  }
  func.func @transform_10(%arg0: i32) -> (i32, i32) {
    %c0_i32 = arith.constant 0 : i32
    %c0_i32_0 = arith.constant 0 : i32
    %c0_i32_1 = arith.constant 0 : i32
    return %c0_i32, %c0_i32_0 : i32, i32
  }
  func.func @transform_11(%arg0: i32) -> (i32, i32, i32) {
    %c0_i32 = arith.constant 0 : i32
    %c0_i32_0 = arith.constant 0 : i32
    %c0_i32_1 = arith.constant 0 : i32
    return %arg0, %c0_i32, %c0_i32_0 : i32, i32, i32
  }
  func.func @transform_12(%arg0: i32) -> (i32, i32, i32) {
    %c0_i32 = arith.constant 0 : i32
    %c0_i32_0 = arith.constant 0 : i32
    %c0_i32_1 = arith.constant 0 : i32
    return %arg0, %c0_i32, %c0_i32_0 : i32, i32, i32
  }
  func.func @transform_13(%arg0: i32) -> (i32, i32, i32) {
    %c0_i32 = arith.constant 0 : i32
    %c0_i32_0 = arith.constant 0 : i32
    %c0_i32_1 = arith.constant 0 : i32
    return %arg0, %c0_i32, %c0_i32_0 : i32, i32, i32
  }
}

</mosaic_0001>

<llo_original>
// kernel: light_pan_forward.1
$region0: #{light_pan_forward.1}
  #allocation0 [shape = 'u32[]', space=smem, size = 0x4, offset = 0x4, fixed_abs, tag = 'smem constant byte address 0x4 - core index']
  #allocation1 [shape = 'u32[72,128]{1,0:T(1,128)}', space=vmem, size = 0x9000, scoped, tag = 'internal scratch']
  %s0 = inlined_call_operand.vmem [shape: f32[2,64,256], index: 0, kind: input, shape index: {}]
  %s1 = inlined_call_operand.vmem [shape: f32[2,128,64], index: 1, kind: input, shape index: {}]
  %s2 = inlined_call_operand.vmem [shape: f32[2,256,16], index: 2, kind: input, shape index: {}]
  %s3 = inlined_call_operand.vmem [shape: f32[64,64], index: 3, kind: input, shape index: {}]
  %s4 = inlined_call_operand.vmem [shape: f32[64,1], index: 4, kind: input, shape index: {}]
  %s5 = inlined_call_operand.vmem [shape: f32[64,128], index: 5, kind: input, shape index: {}]
  %s6 = inlined_call_operand.vmem [shape: f32[64,1], index: 6, kind: input, shape index: {}]
  %s7 = inlined_call_operand.vmem [shape: f32[64,256], index: 7, kind: input, shape index: {}]
  %s8 = inlined_call_operand.vmem [shape: f32[64,1], index: 8, kind: input, shape index: {}]
  %s9 = inlined_call_operand.vmem [shape: f32[64,256], index: 9, kind: input, shape index: {}]
  %s10 = inlined_call_operand.vmem [shape: f32[16,64], index: 10, kind: input, shape index: {}]
  %s11 = inlined_call_operand.vmem [shape: f32[2,64,256], index: 11, kind: output, shape index: {0}]
  %s12 = inlined_call_operand.vmem [shape: f32[2,64,64], index: 12, kind: output, shape index: {1}]
  %s13 = inlined_call_operand.vmem [shape: f32[2,64,16], index: 13, kind: output, shape index: {2}]
  %14 = xla_tuple %s11, %s12, %s13
  %s15 = sld [smem:[#allocation0]]
  $region93: #{light_pan_forward.1} parent=0
    _
  %s17 = ssub.s32 1, %s15
  %s18 = scalar_select 0, %s17, %s15
  loop: start=0, step=1, limit=4
  $region2: #{light_pan_forward.1} parent=0 // loop_pre_header
    _
  $region3: #{light_pan_forward.1} parent=0 // loop_header
    %s20 = sphi 0, %s24
    %p21 = scmp.ge.s32.totalorder %s20, 4
    %s30 = sphi 0, %s32
    %s33 = sphi 0, %s30
    %s34 = sphi 0, %s33
    %s50 = sphi 0, %s34
    %s56 = sphi 0, %s58
    %s59 = sphi 0, %s56
    %s60 = sphi 0, %s59
    %s76 = sphi 0, %s60
    %s82 = sphi 0, %s84
    %s85 = sphi 0, %s82
    %s86 = sphi 0, %s85
    %s102 = sphi 0, %s86
    %s106 = sphi 0, %s106
    %s108 = sphi 0, %s106
    %s109 = sphi 0, %s108
    %s123 = sphi 0, %s109
    %s127 = sphi 0, %s127
    %s129 = sphi 0, %s127
    %s130 = sphi 0, %s129
    %s144 = sphi 0, %s130
    %s148 = sphi 0, %s148
    %s150 = sphi 0, %s148
    %s151 = sphi 0, %s150
    %s165 = sphi 0, %s151
    %s169 = sphi 0, %s169
    %s171 = sphi 0, %s169
    %s172 = sphi 0, %s171
    %s186 = sphi 0, %s172
    %s190 = sphi 0, %s190
    %s192 = sphi 0, %s190
    %s193 = sphi 0, %s192
    %s207 = sphi 0, %s193
    %s211 = sphi 0, %s211
    %s213 = sphi 0, %s211
    %s214 = sphi 0, %s213
    %s228 = sphi 0, %s214
    %s232 = sphi 0, %s232
    %s234 = sphi 0, %s232
    %s235 = sphi 0, %s234
    %s249 = sphi 0, %s235
    %s253 = sphi 0, %s253
    %s255 = sphi 0, %s253
    %s256 = sphi 0, %s255
    %s270 = sphi 0, %s256
    %s276 = sphi 0, %s278
    %s279 = sphi 0, %s276
    %s280 = sphi 0, %s279
    %s296 = sphi 0, %s280
    %s302 = sphi 0, %s304
    %s305 = sphi 0, %s302
    %s306 = sphi 0, %s305
    %s322 = sphi 0, %s306
    %s328 = sphi 0, %s330
    %s331 = sphi 0, %s328
    %s332 = sphi 0, %s331
    %s348 = sphi 0, %s332
  $region4: #{light_pan_forward.1} parent=0 // loop_header_branch
    %23 = sbr.rel (%p21) target = $region8
  $region5: #{light_pan_forward.1} parent=0 // loop_body
    %s25 = ssub.s32 %s20, 1
    %s26 = ssub.s32 %s20, 2
    %s27 = sadd.s32 %s20, 1
    %s28 = ssub.s32 %s20, %s27
    %p29 = scmp.eq.s32.totalorder %s28, 0
    %s31 = sadd.s32 %s30, 1
    %s32 = scalar_select %p29, %s30, %s31
    %p35 = pneg %p29
    %p36 = scmp.eq.s32.totalorder %s20, 1
    %p37 = por %p35, %p36
    %p38 = scmp.ne.s32.totalorder %s30, %s33
    %p39 = scmp.eq.s32.totalorder %s20, 0
    %p40 = por %p38, %p39
    %p41 = scmp.ne.s32.totalorder %s30, %s33
    %p42 = scmp.eq.s32.totalorder %s25, 1
    %p43 = por %p41, %p42
    %p44 = scmp.ne.s32.totalorder %s33, %s34
    %p45 = scmp.eq.s32.totalorder %s25, 0
    %p46 = por %p44, %p45
    %p47 = scmp.ne.s32.totalorder %s33, %s34
    %p48 = scmp.eq.s32.totalorder %s26, 1
    %p49 = por %p47, %p48
    %p51 = scmp.ne.s32.totalorder %s34, %s50
    %p52 = scmp.eq.s32.totalorder %s26, 0
    %p53 = por %p51, %p52
    %s54 = ssub.s32 %s20, %s27
    %p55 = scmp.eq.s32.totalorder %s54, 0
    %s57 = sadd.s32 %s56, 1
    %s58 = scalar_select %p55, %s56, %s57
    %p61 = pneg %p55
    %p62 = scmp.eq.s32.totalorder %s20, 1
    %p63 = por %p61, %p62
    %p64 = scmp.ne.s32.totalorder %s56, %s59
    %p65 = scmp.eq.s32.totalorder %s20, 0
    %p66 = por %p64, %p65
    %p67 = scmp.ne.s32.totalorder %s56, %s59
    %p68 = scmp.eq.s32.totalorder %s25, 1
    %p69 = por %p67, %p68
    %p70 = scmp.ne.s32.totalorder %s59, %s60
    %p71 = scmp.eq.s32.totalorder %s25, 0
    %p72 = por %p70, %p71
    %p73 = scmp.ne.s32.totalorder %s59, %s60
    %p74 = scmp.eq.s32.totalorder %s26, 1
    %p75 = por %p73, %p74
    %p77 = scmp.ne.s32.totalorder %s60, %s76
    %p78 = scmp.eq.s32.totalorder %s26, 0
    %p79 = por %p77, %p78
    %s80 = ssub.s32 %s20, %s27
    %p81 = scmp.eq.s32.totalorder %s80, 0
    %s83 = sadd.s32 %s82, 1
    %s84 = scalar_select %p81, %s82, %s83
    %p87 = pneg %p81
    %p88 = scmp.eq.s32.totalorder %s20, 1
    %p89 = por %p87, %p88
    %p90 = scmp.ne.s32.totalorder %s82, %s85
    %p91 = scmp.eq.s32.totalorder %s20, 0
    %p92 = por %p90, %p91
    %p93 = scmp.ne.s32.totalorder %s82, %s85
    %p94 = scmp.eq.s32.totalorder %s25, 1
    %p95 = por %p93, %p94
    %p96 = scmp.ne.s32.totalorder %s85, %s86
    %p97 = scmp.eq.s32.totalorder %s25, 0
    %p98 = por %p96, %p97
    %p99 = scmp.ne.s32.totalorder %s85, %s86
    %p100 = scmp.eq.s32.totalorder %s26, 1
    %p101 = por %p99, %p100
    %p103 = scmp.ne.s32.totalorder %s86, %s102
    %p104 = scmp.eq.s32.totalorder %s26, 0
    %p105 = por %p103, %p104
    %s107 = sadd.s32 %s106, 1
    %p110 = scmp.eq.s32.totalorder %s20, 1
    %p111 = scmp.ne.s32.totalorder %s106, %s108
    %p112 = scmp.eq.s32.totalorder %s20, 0
    %p113 = por %p111, %p112
    %p114 = scmp.ne.s32.totalorder %s106, %s108
    %p115 = scmp.eq.s32.totalorder %s25, 1
    %p116 = por %p114, %p115
    %p117 = scmp.ne.s32.totalorder %s108, %s109
    %p118 = scmp.eq.s32.totalorder %s25, 0
    %p119 = por %p117, %p118
    %p120 = scmp.ne.s32.totalorder %s108, %s109
    %p121 = scmp.eq.s32.totalorder %s26, 1
    %p122 = por %p120, %p121
    %p124 = scmp.ne.s32.totalorder %s109, %s123
    %p125 = scmp.eq.s32.totalorder %s26, 0
    %p126 = por %p124, %p125
    %s128 = sadd.s32 %s127, 1
    %p131 = scmp.eq.s32.totalorder %s20, 1
    %p132 = scmp.ne.s32.totalorder %s127, %s129
    %p133 = scmp.eq.s32.totalorder %s20, 0
    %p134 = por %p132, %p133
    %p135 = scmp.ne.s32.totalorder %s127, %s129
    %p136 = scmp.eq.s32.totalorder %s25, 1
    %p137 = por %p135, %p136
    %p138 = scmp.ne.s32.totalorder %s129, %s130
    %p139 = scmp.eq.s32.totalorder %s25, 0
    %p140 = por %p138, %p139
    %p141 = scmp.ne.s32.totalorder %s129, %s130
    %p142 = scmp.eq.s32.totalorder %s26, 1
    %p143 = por %p141, %p142
    %p145 = scmp.ne.s32.totalorder %s130, %s144
    %p146 = scmp.eq.s32.totalorder %s26, 0
    %p147 = por %p145, %p146
    %s149 = sadd.s32 %s148, 1
    %p152 = scmp.eq.s32.totalorder %s20, 1
    %p153 = scmp.ne.s32.totalorder %s148, %s150
    %p154 = scmp.eq.s32.totalorder %s20, 0
    %p155 = por %p153, %p154
    %p156 = scmp.ne.s32.totalorder %s148, %s150
    %p157 = scmp.eq.s32.totalorder %s25, 1
    %p158 = por %p156, %p157
    %p159 = scmp.ne.s32.totalorder %s150, %s151
    %p160 = scmp.eq.s32.totalorder %s25, 0
    %p161 = por %p159, %p160
    %p162 = scmp.ne.s32.totalorder %s150, %s151
    %p163 = scmp.eq.s32.totalorder %s26, 1
    %p164 = por %p162, %p163
    %p166 = scmp.ne.s32.totalorder %s151, %s165
    %p167 = scmp.eq.s32.totalorder %s26, 0
    %p168 = por %p166, %p167
    %s170 = sadd.s32 %s169, 1
    %p173 = scmp.eq.s32.totalorder %s20, 1
    %p174 = scmp.ne.s32.totalorder %s169, %s171
    %p175 = scmp.eq.s32.totalorder %s20, 0
    %p176 = por %p174, %p175
    %p177 = scmp.ne.s32.totalorder %s169, %s171
    %p178 = scmp.eq.s32.totalorder %s25, 1
    %p179 = por %p177, %p178
    %p180 = scmp.ne.s32.totalorder %s171, %s172
    %p181 = scmp.eq.s32.totalorder %s25, 0
    %p182 = por %p180, %p181
    %p183 = scmp.ne.s32.totalorder %s171, %s172
    %p184 = scmp.eq.s32.totalorder %s26, 1
    %p185 = por %p183, %p184
    %p187 = scmp.ne.s32.totalorder %s172, %s186
    %p188 = scmp.eq.s32.totalorder %s26, 0
    %p189 = por %p187, %p188
    %s191 = sadd.s32 %s190, 1
    %p194 = scmp.eq.s32.totalorder %s20, 1
    %p195 = scmp.ne.s32.totalorder %s190, %s192
    %p196 = scmp.eq.s32.totalorder %s20, 0
    %p197 = por %p195, %p196
    %p198 = scmp.ne.s32.totalorder %s190, %s192
    %p199 = scmp.eq.s32.totalorder %s25, 1
    %p200 = por %p198, %p199
    %p201 = scmp.ne.s32.totalorder %s192, %s193
    %p202 = scmp.eq.s32.totalorder %s25, 0
    %p203 = por %p201, %p202
    %p204 = scmp.ne.s32.totalorder %s192, %s193
    %p205 = scmp.eq.s32.totalorder %s26, 1
    %p206 = por %p204, %p205
    %p208 = scmp.ne.s32.totalorder %s193, %s207
    %p209 = scmp.eq.s32.totalorder %s26, 0
    %p210 = por %p208, %p209
    %s212 = sadd.s32 %s211, 1
    %p215 = scmp.eq.s32.totalorder %s20, 1
    %p216 = scmp.ne.s32.totalorder %s211, %s213
    %p217 = scmp.eq.s32.totalorder %s20, 0
    %p218 = por %p216, %p217
    %p219 = scmp.ne.s32.totalorder %s211, %s213
    %p220 = scmp.eq.s32.totalorder %s25, 1
    %p221 = por %p219, %p220
    %p222 = scmp.ne.s32.totalorder %s213, %s214
    %p223 = scmp.eq.s32.totalorder %s25, 0
    %p224 = por %p222, %p223
    %p225 = scmp.ne.s32.totalorder %s213, %s214
    %p226 = scmp.eq.s32.totalorder %s26, 1
    %p227 = por %p225, %p226
    %p229 = scmp.ne.s32.totalorder %s214, %s228
    %p230 = scmp.eq.s32.totalorder %s26, 0
    %p231 = por %p229, %p230
    %s233 = sadd.s32 %s232, 1
    %p236 = scmp.eq.s32.totalorder %s20, 1
    %p237 = scmp.ne.s32.totalorder %s232, %s234
    %p238 = scmp.eq.s32.totalorder %s20, 0
    %p239 = por %p237, %p238
    %p240 = scmp.ne.s32.totalorder %s232, %s234
    %p241 = scmp.eq.s32.totalorder %s25, 1
    %p242 = por %p240, %p241
    %p243 = scmp.ne.s32.totalorder %s234, %s235
    %p244 = scmp.eq.s32.totalorder %s25, 0
    %p245 = por %p243, %p244
    %p246 = scmp.ne.s32.totalorder %s234, %s235
    %p247 = scmp.eq.s32.totalorder %s26, 1
    %p248 = por %p246, %p247
    %p250 = scmp.ne.s32.totalorder %s235, %s249
    %p251 = scmp.eq.s32.totalorder %s26, 0
    %p252 = por %p250, %p251
    %s254 = sadd.s32 %s253, 1
    %p257 = scmp.eq.s32.totalorder %s20, 1
    %p258 = scmp.ne.s32.totalorder %s253, %s255
    %p259 = scmp.eq.s32.totalorder %s20, 0
    %p260 = por %p258, %p259
    %p261 = scmp.ne.s32.totalorder %s253, %s255
    %p262 = scmp.eq.s32.totalorder %s25, 1
    %p263 = por %p261, %p262
    %p264 = scmp.ne.s32.totalorder %s255, %s256
    %p265 = scmp.eq.s32.totalorder %s25, 0
    %p266 = por %p264, %p265
    %p267 = scmp.ne.s32.totalorder %s255, %s256
    %p268 = scmp.eq.s32.totalorder %s26, 1
    %p269 = por %p267, %p268
    %p271 = scmp.ne.s32.totalorder %s256, %s270
    %p272 = scmp.eq.s32.totalorder %s26, 0
    %p273 = por %p271, %p272
    %s274 = ssub.s32 %s20, %s27
    %p275 = scmp.eq.s32.totalorder %s274, 0
    %s277 = sadd.s32 %s276, 1
    %s278 = scalar_select %p275, %s276, %s277
    %p281 = pneg %p275
    %p282 = scmp.eq.s32.totalorder %s20, 1
    %p283 = por %p281, %p282
    %p284 = scmp.ne.s32.totalorder %s276, %s279
    %p285 = scmp.eq.s32.totalorder %s20, 0
    %p286 = por %p284, %p285
    %p287 = scmp.ne.s32.totalorder %s276, %s279
    %p288 = scmp.eq.s32.totalorder %s25, 1
    %p289 = por %p287, %p288
    %p290 = scmp.ne.s32.totalorder %s279, %s280
    %p291 = scmp.eq.s32.totalorder %s25, 0
    %p292 = por %p290, %p291
    %p293 = scmp.ne.s32.totalorder %s279, %s280
    %p294 = scmp.eq.s32.totalorder %s26, 1
    %p295 = por %p293, %p294
    %p297 = scmp.ne.s32.totalorder %s280, %s296
    %p298 = scmp.eq.s32.totalorder %s26, 0
    %p299 = por %p297, %p298
    %s300 = ssub.s32 %s20, %s27
    %p301 = scmp.eq.s32.totalorder %s300, 0
    %s303 = sadd.s32 %s302, 1
    %s304 = scalar_select %p301, %s302, %s303
    %p307 = pneg %p301
    %p308 = scmp.eq.s32.totalorder %s20, 1
    %p309 = por %p307, %p308
    %p310 = scmp.ne.s32.totalorder %s302, %s305
    %p311 = scmp.eq.s32.totalorder %s20, 0
    %p312 = por %p310, %p311
    %p313 = scmp.ne.s32.totalorder %s302, %s305
    %p314 = scmp.eq.s32.totalorder %s25, 1
    %p315 = por %p313, %p314
    %p316 = scmp.ne.s32.totalorder %s305, %s306
    %p317 = scmp.eq.s32.totalorder %s25, 0
    %p318 = por %p316, %p317
    %p319 = scmp.ne.s32.totalorder %s305, %s306
    %p320 = scmp.eq.s32.totalorder %s26, 1
    %p321 = por %p319, %p320
    %p323 = scmp.ne.s32.totalorder %s306, %s322
    %p324 = scmp.eq.s32.totalorder %s26, 0
    %p325 = por %p323, %p324
    %s326 = ssub.s32 %s20, %s27
    %p327 = scmp.eq.s32.totalorder %s326, 0
    %s329 = sadd.s32 %s328, 1
    %s330 = scalar_select %p327, %s328, %s329
    %p333 = pneg %p327
    %p334 = scmp.eq.s32.totalorder %s20, 1
    %p335 = por %p333, %p334
    %p336 = scmp.ne.s32.totalorder %s328, %s331
    %p337 = scmp.eq.s32.totalorder %s20, 0
    %p338 = por %p336, %p337
    %p339 = scmp.ne.s32.totalorder %s328, %s331
    %p340 = scmp.eq.s32.totalorder %s25, 1
    %p341 = por %p339, %p340
    %p342 = scmp.ne.s32.totalorder %s331, %s332
    %p343 = scmp.eq.s32.totalorder %s25, 0
    %p344 = por %p342, %p343
    %p345 = scmp.ne.s32.totalorder %s331, %s332
    %p346 = scmp.eq.s32.totalorder %s26, 1
    %p347 = por %p345, %p346
    %p349 = scmp.ne.s32.totalorder %s332, %s348
    %p350 = scmp.eq.s32.totalorder %s26, 0
    %p351 = por %p349, %p350
    %p352 = scmp.le.s32.totalorder 1, %s20
    %p353 = scmp.lt.s32.totalorder %s20, 3
    %p354 = pnand %p352, %p353
    %p355 = pneg %p354
    // Predicated region
    $region9: #{light_pan_forward.1} parent=5 // pred_check
      _
    $region10: #{light_pan_forward.1} parent=5 // pred_check_branch
      %357 = sbr.rel (%p354) target = $region12
    $region11: #{light_pan_forward.1} parent=5 // pred_region
      %s358 = ssub.s32 %s20, 1
      // Predicated region
      $region13: #{light_pan_forward.1} parent=11 // pred_check
        %p359 = pneg %p119
      $region14: #{light_pan_forward.1} parent=11 // pred_check_branch
        %361 = sbr.rel (%p359) target = $region16
      $region15: #{light_pan_forward.1} parent=11 // pred_region
        _
      $region16: #{light_pan_forward.1} parent=11 // pred_fallthru
        _
      // Predicated region
      $region17: #{light_pan_forward.1} parent=11 // pred_check
        %p362 = pneg %p140
      $region18: #{light_pan_forward.1} parent=11 // pred_check_branch
        %364 = sbr.rel (%p362) target = $region20
      $region19: #{light_pan_forward.1} parent=11 // pred_region
        _
      $region20: #{light_pan_forward.1} parent=11 // pred_fallthru
        _
      // Predicated region
      $region21: #{light_pan_forward.1} parent=11 // pred_check
        %p365 = pneg %p161
      $region22: #{light_pan_forward.1} parent=11 // pred_check_branch
        %367 = sbr.rel (%p365) target = $region24
      $region23: #{light_pan_forward.1} parent=11 // pred_region
        _
      $region24: #{light_pan_forward.1} parent=11 // pred_fallthru
        _
      // Predicated region
      $region25: #{light_pan_forward.1} parent=11 // pred_check
        %p368 = pneg %p182
      $region26: #{light_pan_forward.1} parent=11 // pred_check_branch
        %370 = sbr.rel (%p368) target = $region28
      $region27: #{light_pan_forward.1} parent=11 // pred_region
        _
      $region28: #{light_pan_forward.1} parent=11 // pred_fallthru
        _
      // Predicated region
      $region29: #{light_pan_forward.1} parent=11 // pred_check
        %p371 = pneg %p203
      $region30: #{light_pan_forward.1} parent=11 // pred_check_branch
        %373 = sbr.rel (%p371) target = $region32
      $region31: #{light_pan_forward.1} parent=11 // pred_region
        _
      $region32: #{light_pan_forward.1} parent=11 // pred_fallthru
        _
      // Predicated region
      $region33: #{light_pan_forward.1} parent=11 // pred_check
        %p374 = pneg %p224
      $region34: #{light_pan_forward.1} parent=11 // pred_check_branch
        %376 = sbr.rel (%p374) target = $region36
      $region35: #{light_pan_forward.1} parent=11 // pred_region
        _
      $region36: #{light_pan_forward.1} parent=11 // pred_fallthru
        _
      // Predicated region
      $region37: #{light_pan_forward.1} parent=11 // pred_check
        %p377 = pneg %p245
      $region38: #{light_pan_forward.1} parent=11 // pred_check_branch
        %379 = sbr.rel (%p377) target = $region40
      $region39: #{light_pan_forward.1} parent=11 // pred_region
        _
      $region40: #{light_pan_forward.1} parent=11 // pred_fallthru
        _
      // Predicated region
      $region41: #{light_pan_forward.1} parent=11 // pred_check
        %p380 = pneg %p266
      $region42: #{light_pan_forward.1} parent=11 // pred_check_branch
        %382 = sbr.rel (%p380) target = $region44
      $region43: #{light_pan_forward.1} parent=11 // pred_region
        _
      $region44: #{light_pan_forward.1} parent=11 // pred_fallthru
        _
    $region12: #{light_pan_forward.1} parent=5 // pred_fallthru
      _
    %p383 = scmp.lt.s32.totalorder %s20, 2
    // Predicated region
    $region45: #{light_pan_forward.1} parent=5 // pred_check
      %p384 = pneg %p383
    $region46: #{light_pan_forward.1} parent=5 // pred_check_branch
      %386 = sbr.rel (%p384) target = $region48
    $region47: #{light_pan_forward.1} parent=5 // pred_region
      // Predicated region
      $region49: #{light_pan_forward.1} parent=47 // pred_check
        %p387 = pneg %p40
      $region50: #{light_pan_forward.1} parent=47 // pred_check_branch
        %389 = sbr.rel (%p387) target = $region52
      $region51: #{light_pan_forward.1} parent=47 // pred_region
        %p390 = scmp.lt.s32.totalorder %s20, 1
        %s391 = scalar_select %p390, %s20, 1
        %s392 = smul.addr %s391, 16
        %s393 = smul.addr %s392, 8
        %s394 = scalar_lea.vmem %s0, %s393
      $region52: #{light_pan_forward.1} parent=47 // pred_fallthru
        _
      // Predicated region
      $region53: #{light_pan_forward.1} parent=47 // pred_check
        %p395 = pneg %p66
      $region54: #{light_pan_forward.1} parent=47 // pred_check_branch
        %397 = sbr.rel (%p395) target = $region56
      $region55: #{light_pan_forward.1} parent=47 // pred_region
        %p398 = scmp.lt.s32.totalorder %s20, 1
        %s399 = scalar_select %p398, %s20, 1
        %s400 = smul.addr %s399, 16
        %s401 = smul.addr %s400, 8
        %s402 = scalar_lea.vmem %s1, %s401
      $region56: #{light_pan_forward.1} parent=47 // pred_fallthru
        _
      // Predicated region
      $region57: #{light_pan_forward.1} parent=47 // pred_check
        %p403 = pneg %p92
      $region58: #{light_pan_forward.1} parent=47 // pred_check_branch
        %405 = sbr.rel (%p403) target = $region60
      $region59: #{light_pan_forward.1} parent=47 // pred_region
        %p406 = scmp.lt.s32.totalorder %s20, 1
        %s407 = scalar_select %p406, %s20, 1
        %s408 = smul.addr %s407, 32
        %s409 = smul.addr %s408, 8
        %s410 = scalar_lea.vmem %s2, %s409
      $region60: #{light_pan_forward.1} parent=47 // pred_fallthru
        _
    $region48: #{light_pan_forward.1} parent=5 // pred_fallthru
      _
    %p411 = scmp.le.s32.totalorder 1, %s20
    %p412 = scmp.lt.s32.totalorder %s20, 3
    %p413 = pnand %p411, %p412
    %p414 = pneg %p413
    // Predicated region
    $region61: #{light_pan_forward.1} parent=5 // pred_check
      _
    $region62: #{light_pan_forward.1} parent=5 // pred_check_branch
      %416 = sbr.rel (%p413) target = $region64
    $region63: #{light_pan_forward.1} parent=5 // pred_region
      %s417 = ssub.s32 %s20, 1
      %p418 = scmp.lt.s32.totalorder %s25, 1
      %s419 = scalar_select %p418, %s25, 1
      %s420 = smul.addr %s419, 16
      %s421 = smul.addr %s420, 8
      %s422 = scalar_lea.vmem %s0, %s421
      %p423 = pneg %p46
      %p424 = pneg %p43
      %p425 = scmp.lt.s32.totalorder %s25, 1
      %s426 = scalar_select %p425, %s25, 1
      %s427 = smul.addr %s426, 16
      %s428 = smul.addr %s427, 8
      %s429 = scalar_lea.vmem %s1, %s428
      %p430 = pneg %p72
      %p431 = pneg %p69
      %p432 = scmp.lt.s32.totalorder %s25, 1
      %s433 = scalar_select %p432, %s25, 1
      %s434 = smul.addr %s433, 32
      %s435 = smul.addr %s434, 8
      %s436 = scalar_lea.vmem %s2, %s435
      %p437 = pneg %p98
      %p438 = pneg %p95
      %p439 = pneg %p119
      %p440 = pneg %p116
      %p441 = pneg %p140
      %p442 = pneg %p137
      %p443 = pneg %p161
      %p444 = pneg %p158
      %p445 = pneg %p182
      %p446 = pneg %p179
      %p447 = pneg %p203
      %p448 = pneg %p200
      %p449 = pneg %p224
      %p450 = pneg %p221
      %p451 = pneg %p245
      %p452 = pneg %p242
      %p453 = pneg %p266
      %p454 = pneg %p263
      %p455 = pneg %p292
      %p456 = pneg %p289
      %p457 = scmp.lt.s32.totalorder %s25, 1
      %s458 = scalar_select %p457, %s25, 1
      %s459 = smul.addr %s458, 16
      %s460 = smul.addr %s459, 8
      %s461 = scalar_lea.vmem %s11, %s460
      %p462 = pneg %p318
      %p463 = pneg %p315
      %p464 = scmp.lt.s32.totalorder %s25, 1
      %s465 = scalar_select %p464, %s25, 1
      %s466 = smul.addr %s465, 8
      %s467 = smul.addr %s466, 8
      %s468 = scalar_lea.vmem %s12, %s467
      %p469 = pneg %p344
      %p470 = pneg %p341
      %p471 = scmp.lt.s32.totalorder %s25, 1
      %s472 = scalar_select %p471, %s25, 1
      %s473 = smul.addr %s472, 8
      %s474 = smul.addr %s473, 8
      %s475 = scalar_lea.vmem %s13, %s474
      %p476 = scmp.lt.s32.totalorder %s25, 1
      %s477 = scalar_select %p476, %s25, 1
      %s478 = smul.addr %s477, 16
      %s479 = smul.addr %s478, 8
      %s480 = scalar_lea.vmem %s0, %s479
      %p481 = scmp.lt.s32.totalorder %s25, 1
      %s482 = scalar_select %p481, %s25, 1
      %s483 = smul.addr %s482, 16
      %s484 = smul.addr %s483, 8
      %s485 = scalar_lea.vmem %s1, %s484
      %p486 = scmp.lt.s32.totalorder %s25, 1
      %s487 = scalar_select %p486, %s25, 1
      %s488 = smul.addr %s487, 32
      %s489 = smul.addr %s488, 8
      %s490 = scalar_lea.vmem %s2, %s489
      %p491 = scmp.lt.s32.totalorder %s25, 1
      %s492 = scalar_select %p491, %s25, 1
      %s493 = smul.addr %s492, 16
      %s494 = smul.addr %s493, 8
      %s495 = scalar_lea.vmem %s11, %s494
      %p496 = scmp.lt.s32.totalorder %s25, 1
      %s497 = scalar_select %p496, %s25, 1
      %s498 = smul.addr %s497, 8
      %s499 = smul.addr %s498, 8
      %s500 = scalar_lea.vmem %s12, %s499
      %p501 = scmp.lt.s32.totalorder %s25, 1
      %s502 = scalar_select %p501, %s25, 1
      %s503 = smul.addr %s502, 8
      %s504 = smul.addr %s503, 8
      %s505 = scalar_lea.vmem %s13, %s504
      %v506 = vld [vmem:[%s480] sm:$0xff]
      %v507 = vld [vmem:[%s480 + $0x8] sm:$0xff]
      %v508 = vld [vmem:[%s480 + $0x10] sm:$0xff]
      %v509 = vld [vmem:[%s480 + $0x18] sm:$0xff]
      %v510 = vld [vmem:[%s480 + $0x20] sm:$0xff]
      %v511 = vld [vmem:[%s480 + $0x28] sm:$0xff]
      %v512 = vld [vmem:[%s480 + $0x30] sm:$0xff]
      %v513 = vld [vmem:[%s480 + $0x38] sm:$0xff]
      %v514 = vld [vmem:[%s480 + $0x40] sm:$0xff]
      %v515 = vld [vmem:[%s480 + $0x48] sm:$0xff]
      %v516 = vld [vmem:[%s480 + $0x50] sm:$0xff]
      %v517 = vld [vmem:[%s480 + $0x58] sm:$0xff]
      %v518 = vld [vmem:[%s480 + $0x60] sm:$0xff]
      %v519 = vld [vmem:[%s480 + $0x68] sm:$0xff]
      %v520 = vld [vmem:[%s480 + $0x70] sm:$0xff]
      %v521 = vld [vmem:[%s480 + $0x78] sm:$0xff]
      %v522 = vld [vmem:[%s485] sm:$0xff]
      %v523 = vld [vmem:[%s485 + $0x8] sm:$0xff]
      %v524 = vld [vmem:[%s485 + $0x10] sm:$0xff]
      %v525 = vld [vmem:[%s485 + $0x18] sm:$0xff]
      %v526 = vld [vmem:[%s485 + $0x20] sm:$0xff]
      %v527 = vld [vmem:[%s485 + $0x28] sm:$0xff]
      %v528 = vld [vmem:[%s485 + $0x30] sm:$0xff]
      %v529 = vld [vmem:[%s485 + $0x38] sm:$0xff]
      %v530 = vld [vmem:[%s485 + $0x40] sm:$0xff]
      %v531 = vld [vmem:[%s485 + $0x48] sm:$0xff]
      %v532 = vld [vmem:[%s485 + $0x50] sm:$0xff]
      %v533 = vld [vmem:[%s485 + $0x58] sm:$0xff]
      %v534 = vld [vmem:[%s485 + $0x60] sm:$0xff]
      %v535 = vld [vmem:[%s485 + $0x68] sm:$0xff]
      %v536 = vld [vmem:[%s485 + $0x70] sm:$0xff]
      %v537 = vld [vmem:[%s485 + $0x78] sm:$0xff]
      %v538 = vld [vmem:[%s490] sm:$0xff]
      %v539 = vld [vmem:[%s490 + $0x8] sm:$0xff]
      %v540 = vld [vmem:[%s490 + $0x10] sm:$0xff]
      %v541 = vld [vmem:[%s490 + $0x18] sm:$0xff]
      %v542 = vld [vmem:[%s490 + $0x20] sm:$0xff]
      %v543 = vld [vmem:[%s490 + $0x28] sm:$0xff]
      %v544 = vld [vmem:[%s490 + $0x30] sm:$0xff]
      %v545 = vld [vmem:[%s490 + $0x38] sm:$0xff]
      %v546 = vld [vmem:[%s490 + $0x40] sm:$0xff]
      %v547 = vld [vmem:[%s490 + $0x48] sm:$0xff]
      %v548 = vld [vmem:[%s490 + $0x50] sm:$0xff]
      %v549 = vld [vmem:[%s490 + $0x58] sm:$0xff]
      %v550 = vld [vmem:[%s490 + $0x60] sm:$0xff]
      %v551 = vld [vmem:[%s490 + $0x68] sm:$0xff]
      %v552 = vld [vmem:[%s490 + $0x70] sm:$0xff]
      %v553 = vld [vmem:[%s490 + $0x78] sm:$0xff]
      %v554 = vld [vmem:[%s490 + $0x80] sm:$0xff]
      %v555 = vld [vmem:[%s490 + $0x88] sm:$0xff]
      %v556 = vld [vmem:[%s490 + $0x90] sm:$0xff]
      %v557 = vld [vmem:[%s490 + $0x98] sm:$0xff]
      %v558 = vld [vmem:[%s490 + $0xa0] sm:$0xff]
      %v559 = vld [vmem:[%s490 + $0xa8] sm:$0xff]
      %v560 = vld [vmem:[%s490 + $0xb0] sm:$0xff]
      %v561 = vld [vmem:[%s490 + $0xb8] sm:$0xff]
      %v562 = vld [vmem:[%s490 + $0xc0] sm:$0xff]
      %v563 = vld [vmem:[%s490 + $0xc8] sm:$0xff]
      %v564 = vld [vmem:[%s490 + $0xd0] sm:$0xff]
      %v565 = vld [vmem:[%s490 + $0xd8] sm:$0xff]
      %v566 = vld [vmem:[%s490 + $0xe0] sm:$0xff]
      %v567 = vld [vmem:[%s490 + $0xe8] sm:$0xff]
      %v568 = vld [vmem:[%s490 + $0xf0] sm:$0xff]
      %v569 = vld [vmem:[%s490 + $0xf8] sm:$0xff]
      %v570 = vld [vmem:[%s7] sm:$0xff]
      %v571 = vld [vmem:[%s7 + $0x8] sm:$0xff]
      %v572 = vld [vmem:[%s7 + $0x10] sm:$0xff]
      %v573 = vld [vmem:[%s7 + $0x18] sm:$0xff]
      %v574 = vld [vmem:[%s7 + $0x20] sm:$0xff]
      %v575 = vld [vmem:[%s7 + $0x28] sm:$0xff]
      %v576 = vld [vmem:[%s7 + $0x30] sm:$0xff]
      %v577 = vld [vmem:[%s7 + $0x38] sm:$0xff]
      %v578 = vld [vmem:[%s7 + $0x40] sm:$0xff]
      %v579 = vld [vmem:[%s7 + $0x48] sm:$0xff]
      %v580 = vld [vmem:[%s7 + $0x50] sm:$0xff]
      %v581 = vld [vmem:[%s7 + $0x58] sm:$0xff]
      %v582 = vld [vmem:[%s7 + $0x60] sm:$0xff]
      %v583 = vld [vmem:[%s7 + $0x68] sm:$0xff]
      %v584 = vld [vmem:[%s7 + $0x70] sm:$0xff]
      %v585 = vld [vmem:[%s7 + $0x78] sm:$0xff]
      %v586 = vld [vmem:[%s8] sm:$0xff]
      %v587 = vld [vmem:[%s8 + $0x8] sm:$0xff]
      %v588 = vld [vmem:[%s8 + $0x10] sm:$0xff]
      %v589 = vld [vmem:[%s8 + $0x18] sm:$0xff]
      %v590 = vld [vmem:[%s8 + $0x20] sm:$0xff]
      %v591 = vld [vmem:[%s8 + $0x28] sm:$0xff]
      %v592 = vld [vmem:[%s8 + $0x30] sm:$0xff]
      %v593 = vld [vmem:[%s8 + $0x38] sm:$0xff]
      %595 = vset.pattern.permute.xlu0 0
      %596 = vperm.xlu0 %595, %v586
      %v597 = vpop.permute.xlu0 %596
      %600 = vset.pattern.permute.xlu0 0
      %601 = vperm.xlu0 %600, %v587
      %v602 = vpop.permute.xlu0 %601
      %605 = vset.pattern.permute.xlu0 0
      %606 = vperm.xlu0 %605, %v588
      %v607 = vpop.permute.xlu0 %606
      %610 = vset.pattern.permute.xlu0 0
      %611 = vperm.xlu0 %610, %v589
      %v612 = vpop.permute.xlu0 %611
      %615 = vset.pattern.permute.xlu0 0
      %616 = vperm.xlu0 %615, %v590
      %v617 = vpop.permute.xlu0 %616
      %620 = vset.pattern.permute.xlu0 0
      %621 = vperm.xlu0 %620, %v591
      %v622 = vpop.permute.xlu0 %621
      %625 = vset.pattern.permute.xlu0 0
      %626 = vperm.xlu0 %625, %v592
      %v627 = vpop.permute.xlu0 %626
      %630 = vset.pattern.permute.xlu0 0
      %631 = vperm.xlu0 %630, %v593
      %v632 = vpop.permute.xlu0 %631
      %634 = vmatpush.msra.mxu0 %v553
      %635 = vmatpush.msra.mxu0 %v552
      %636 = vmatpush.msra.mxu0 %v551
      %637 = vmatpush.msra.mxu0 %v550
      %638 = vmatpush.msra.mxu0 %v549
      %639 = vmatpush.msra.mxu0 %v548
      %640 = vmatpush.msra.mxu0 %v547
      %641 = vmatpush.msra.mxu0 %v546
      %642 = vmatpush.msra.mxu0 %v545
      %643 = vmatpush.msra.mxu0 %v544
      %644 = vmatpush.msra.mxu0 %v543
      %645 = vmatpush.msra.mxu0 %v542
      %646 = vmatpush.msra.mxu0 %v541
      %647 = vmatpush.msra.mxu0 %v540
      %648 = vmatpush.msra.mxu0 %v539
      %649 = vmatpush.msra.mxu0 %v538
      %650 = vmatmul.f32.gmra.mxu0 %v570
      %v651 = vpop.f32.mrf.mxu0
      %v652 = vadd.f32 %v597, %v651
      %653 = vmatmul.f32.gmra.mxu0 %v572
      %v654 = vpop.f32.mrf.mxu0
      %v655 = vadd.f32 %v602, %v654
      %656 = vmatmul.f32.gmra.mxu0 %v574
      %v657 = vpop.f32.mrf.mxu0
      %v658 = vadd.f32 %v607, %v657
      %659 = vmatmul.f32.gmra.mxu0 %v576
      %v660 = vpop.f32.mrf.mxu0
      %v661 = vadd.f32 %v612, %v660
      %662 = vmatmul.f32.gmra.mxu0 %v578
      %v663 = vpop.f32.mrf.mxu0
      %v664 = vadd.f32 %v617, %v663
      %665 = vmatmul.f32.gmra.mxu0 %v580
      %v666 = vpop.f32.mrf.mxu0
      %v667 = vadd.f32 %v622, %v666
      %668 = vmatmul.f32.gmra.mxu0 %v582
      %v669 = vpop.f32.mrf.mxu0
      %v670 = vadd.f32 %v627, %v669
      %671 = vmatmul.f32.gmra.mxu0 %v584
      %v672 = vpop.f32.mrf.mxu0
      %v673 = vadd.f32 %v632, %v672
      %674 = vdwg.mxu0
      %675 = vmatpush.msra.mxu0 %v569
      %676 = vmatpush.msra.mxu0 %v568
      %677 = vmatpush.msra.mxu0 %v567
      %678 = vmatpush.msra.mxu0 %v566
      %679 = vmatpush.msra.mxu0 %v565
      %680 = vmatpush.msra.mxu0 %v564
      %681 = vmatpush.msra.mxu0 %v563
      %682 = vmatpush.msra.mxu0 %v562
      %683 = vmatpush.msra.mxu0 %v561
      %684 = vmatpush.msra.mxu0 %v560
      %685 = vmatpush.msra.mxu0 %v559
      %686 = vmatpush.msra.mxu0 %v558
      %687 = vmatpush.msra.mxu0 %v557
      %688 = vmatpush.msra.mxu0 %v556
      %689 = vmatpush.msra.mxu0 %v555
      %690 = vmatpush.msra.mxu0 %v554
      %691 = vmatmul.f32.gmra.mxu0 %v571
      %v692 = vpop.f32.mrf.mxu0
      %v693 = vadd.f32 %v652, %v692
      %694 = vmatmul.f32.gmra.mxu0 %v573
      %v695 = vpop.f32.mrf.mxu0
      %v696 = vadd.f32 %v655, %v695
      %697 = vmatmul.f32.gmra.mxu0 %v575
      %v698 = vpop.f32.mrf.mxu0
      %v699 = vadd.f32 %v658, %v698
      %700 = vmatmul.f32.gmra.mxu0 %v577
      %v701 = vpop.f32.mrf.mxu0
      %v702 = vadd.f32 %v661, %v701
      %703 = vmatmul.f32.gmra.mxu0 %v579
      %v704 = vpop.f32.mrf.mxu0
      %v705 = vadd.f32 %v664, %v704
      %706 = vmatmul.f32.gmra.mxu0 %v581
      %v707 = vpop.f32.mrf.mxu0
      %v708 = vadd.f32 %v667, %v707
      %709 = vmatmul.f32.gmra.mxu0 %v583
      %v710 = vpop.f32.mrf.mxu0
      %v711 = vadd.f32 %v670, %v710
      %712 = vmatmul.f32.gmra.mxu0 %v585
      %v713 = vpop.f32.mrf.mxu0
      %v714 = vadd.f32 %v673, %v713
      %715 = vdwg.mxu0
      %vm716 = vcmask 130048
      %717 = vst.msk [vmem:[%s505] sm:$0xff] %vm716, %v693
      %718 = vst.msk [vmem:[%s505 + $0x8] sm:$0xff] %vm716, %v696
      %719 = vst.msk [vmem:[%s505 + $0x10] sm:$0xff] %vm716, %v699
      %720 = vst.msk [vmem:[%s505 + $0x18] sm:$0xff] %vm716, %v702
      %721 = vst.msk [vmem:[%s505 + $0x20] sm:$0xff] %vm716, %v705
      %722 = vst.msk [vmem:[%s505 + $0x28] sm:$0xff] %vm716, %v708
      %723 = vst.msk [vmem:[%s505 + $0x30] sm:$0xff] %vm716, %v711
      %724 = vst.msk [vmem:[%s505 + $0x38] sm:$0xff] %vm716, %v714
      %v725 = vld [vmem:[%s10] sm:$0xff]
      %v726 = vld [vmem:[%s10 + $0x8] sm:$0xff]
      %v728 = vsel %vm716, %v693, 0
      %v731 = vsel %vm716, %v696, 0
      %v734 = vsel %vm716, %v699, 0
      %v737 = vsel %vm716, %v702, 0
      %v740 = vsel %vm716, %v705, 0
      %v743 = vsel %vm716, %v708, 0
      %v746 = vsel %vm716, %v711, 0
      %v749 = vsel %vm716, %v714, 0
      %751 = vmatpush.msra.mxu0 0.0
      %752 = vmatpush.msra.mxu0 0.0
      %753 = vmatpush.msra.mxu0 0.0
      %754 = vmatpush.msra.mxu0 0.0
      %755 = vmatpush.msra.mxu0 0.0
      %756 = vmatpush.msra.mxu0 0.0
      %757 = vmatpush.msra.mxu0 0.0
      %758 = vmatpush.msra.mxu0 0.0
      %759 = vmatpush.msra.mxu0 0.0
      %760 = vmatpush.msra.mxu0 0.0
      %761 = vmatpush.msra.mxu0 0.0
      %762 = vmatpush.msra.mxu0 0.0
      %763 = vmatpush.msra.mxu0 0.0
      %764 = vmatpush.msra.mxu0 0.0
      %765 = vmatpush.msra.mxu0 %v726
      %766 = vmatpush.msra.mxu0 %v725
      %767 = vmatmul.f32.gmra.mxu0 %v728
      %v768 = vpop.f32.mrf.mxu0
      %v769 = vadd.f32 0.0, %v768
      %770 = vmatmul.f32.gmra.mxu0 %v731
      %v771 = vpop.f32.mrf.mxu0
      %v772 = vadd.f32 0.0, %v771
      %773 = vmatmul.f32.gmra.mxu0 %v734
      %v774 = vpop.f32.mrf.mxu0
      %v775 = vadd.f32 0.0, %v774
      %776 = vmatmul.f32.gmra.mxu0 %v737
      %v777 = vpop.f32.mrf.mxu0
      %v778 = vadd.f32 0.0, %v777
      %779 = vmatmul.f32.gmra.mxu0 %v740
      %v780 = vpop.f32.mrf.mxu0
      %v781 = vadd.f32 0.0, %v780
      %782 = vmatmul.f32.gmra.mxu0 %v743
      %v783 = vpop.f32.mrf.mxu0
      %v784 = vadd.f32 0.0, %v783
      %785 = vmatmul.f32.gmra.mxu0 %v746
      %v786 = vpop.f32.mrf.mxu0
      %v787 = vadd.f32 0.0, %v786
      %788 = vmatmul.f32.gmra.mxu0 %v749
      %v789 = vpop.f32.mrf.mxu0
      %v790 = vadd.f32 0.0, %v789
      %791 = vdwg.mxu0
      %v792 = vld [vmem:[%s5] sm:$0xff]
      %v793 = vld [vmem:[%s5 + $0x8] sm:$0xff]
      %v794 = vld [vmem:[%s5 + $0x10] sm:$0xff]
      %v795 = vld [vmem:[%s5 + $0x18] sm:$0xff]
      %v796 = vld [vmem:[%s5 + $0x20] sm:$0xff]
      %v797 = vld [vmem:[%s5 + $0x28] sm:$0xff]
      %v798 = vld [vmem:[%s5 + $0x30] sm:$0xff]
      %v799 = vld [vmem:[%s5 + $0x38] sm:$0xff]
      %v800 = vld [vmem:[%s6] sm:$0xff]
      %v801 = vld [vmem:[%s6 + $0x8] sm:$0xff]
      %v802 = vld [vmem:[%s6 + $0x10] sm:$0xff]
      %v803 = vld [vmem:[%s6 + $0x18] sm:$0xff]
      %v804 = vld [vmem:[%s6 + $0x20] sm:$0xff]
      %v805 = vld [vmem:[%s6 + $0x28] sm:$0xff]
      %v806 = vld [vmem:[%s6 + $0x30] sm:$0xff]
      %v807 = vld [vmem:[%s6 + $0x38] sm:$0xff]
      %809 = vset.pattern.permute.xlu0 0
      %810 = vperm.xlu0 %809, %v800
      %v811 = vpop.permute.xlu0 %810
      %814 = vset.pattern.permute.xlu0 0
      %815 = vperm.xlu0 %814, %v801
      %v816 = vpop.permute.xlu0 %815
      %819 = vset.pattern.permute.xlu0 0
      %820 = vperm.xlu0 %819, %v802
      %v821 = vpop.permute.xlu0 %820
      %824 = vset.pattern.permute.xlu0 0
      %825 = vperm.xlu0 %824, %v803
      %v826 = vpop.permute.xlu0 %825
      %829 = vset.pattern.permute.xlu0 0
      %830 = vperm.xlu0 %829, %v804
      %v831 = vpop.permute.xlu0 %830
      %834 = vset.pattern.permute.xlu0 0
      %835 = vperm.xlu0 %834, %v805
      %v836 = vpop.permute.xlu0 %835
      %839 = vset.pattern.permute.xlu0 0
      %840 = vperm.xlu0 %839, %v806
      %v841 = vpop.permute.xlu0 %840
      %844 = vset.pattern.permute.xlu0 0
      %845 = vperm.xlu0 %844, %v807
      %v846 = vpop.permute.xlu0 %845
      %848 = vmatpush.msra.mxu0 %v537
      %849 = vmatpush.msra.mxu0 %v536
      %850 = vmatpush.msra.mxu0 %v535
      %851 = vmatpush.msra.mxu0 %v534
      %852 = vmatpush.msra.mxu0 %v533
      %853 = vmatpush.msra.mxu0 %v532
      %854 = vmatpush.msra.mxu0 %v531
      %855 = vmatpush.msra.mxu0 %v530
      %856 = vmatpush.msra.mxu0 %v529
      %857 = vmatpush.msra.mxu0 %v528
      %858 = vmatpush.msra.mxu0 %v527
      %859 = vmatpush.msra.mxu0 %v526
      %860 = vmatpush.msra.mxu0 %v525
      %861 = vmatpush.msra.mxu0 %v524
      %862 = vmatpush.msra.mxu0 %v523
      %863 = vmatpush.msra.mxu0 %v522
      %864 = vmatmul.f32.gmra.mxu0 %v792
      %v865 = vpop.f32.mrf.mxu0
      %v866 = vadd.f32 %v811, %v865
      %867 = vmatmul.f32.gmra.mxu0 %v793
      %v868 = vpop.f32.mrf.mxu0
      %v869 = vadd.f32 %v816, %v868
      %870 = vmatmul.f32.gmra.mxu0 %v794
      %v871 = vpop.f32.mrf.mxu0
      %v872 = vadd.f32 %v821, %v871
      %873 = vmatmul.f32.gmra.mxu0 %v795
      %v874 = vpop.f32.mrf.mxu0
      %v875 = vadd.f32 %v826, %v874
      %876 = vmatmul.f32.gmra.mxu0 %v796
      %v877 = vpop.f32.mrf.mxu0
      %v878 = vadd.f32 %v831, %v877
      %879 = vmatmul.f32.gmra.mxu0 %v797
      %v880 = vpop.f32.mrf.mxu0
      %v881 = vadd.f32 %v836, %v880
      %882 = vmatmul.f32.gmra.mxu0 %v798
      %v883 = vpop.f32.mrf.mxu0
      %v884 = vadd.f32 %v841, %v883
      %885 = vmatmul.f32.gmra.mxu0 %v799
      %v886 = vpop.f32.mrf.mxu0
      %v887 = vadd.f32 %v846, %v886
      %888 = vdwg.mxu0
      %v889 = vadd.f32 %v866, %v769
      %v890 = vadd.f32 %v869, %v772
      %v891 = vadd.f32 %v872, %v775
      %v892 = vadd.f32 %v875, %v778
      %v893 = vadd.f32 %v878, %v781
      %v894 = vadd.f32 %v881, %v784
      %v895 = vadd.f32 %v884, %v787
      %v896 = vadd.f32 %v887, %v790
      %vm897 = vcmask 523264
      %898 = vst.msk [vmem:[%s500] sm:$0xff] %vm897, %v889
      %899 = vst.msk [vmem:[%s500 + $0x8] sm:$0xff] %vm897, %v890
      %900 = vst.msk [vmem:[%s500 + $0x10] sm:$0xff] %vm897, %v891
      %901 = vst.msk [vmem:[%s500 + $0x18] sm:$0xff] %vm897, %v892
      %902 = vst.msk [vmem:[%s500 + $0x20] sm:$0xff] %vm897, %v893
      %903 = vst.msk [vmem:[%s500 + $0x28] sm:$0xff] %vm897, %v894
      %904 = vst.msk [vmem:[%s500 + $0x30] sm:$0xff] %vm897, %v895
      %905 = vst.msk [vmem:[%s500 + $0x38] sm:$0xff] %vm897, %v896
      %v906 = vld [vmem:[%s9] sm:$0xff]
      %v907 = vld [vmem:[%s9 + $0x8] sm:$0xff]
      %v908 = vld [vmem:[%s9 + $0x10] sm:$0xff]
      %v909 = vld [vmem:[%s9 + $0x18] sm:$0xff]
      %v910 = vld [vmem:[%s9 + $0x20] sm:$0xff]
      %v911 = vld [vmem:[%s9 + $0x28] sm:$0xff]
      %v912 = vld [vmem:[%s9 + $0x30] sm:$0xff]
      %v913 = vld [vmem:[%s9 + $0x38] sm:$0xff]
      %v914 = vld [vmem:[%s9 + $0x40] sm:$0xff]
      %v915 = vld [vmem:[%s9 + $0x48] sm:$0xff]
      %v916 = vld [vmem:[%s9 + $0x50] sm:$0xff]
      %v917 = vld [vmem:[%s9 + $0x58] sm:$0xff]
      %v918 = vld [vmem:[%s9 + $0x60] sm:$0xff]
      %v919 = vld [vmem:[%s9 + $0x68] sm:$0xff]
      %v920 = vld [vmem:[%s9 + $0x70] sm:$0xff]
      %v921 = vld [vmem:[%s9 + $0x78] sm:$0xff]
      %v923 = vsel %vm897, %v889, 0
      %v926 = vsel %vm897, %v890, 0
      %v929 = vsel %vm897, %v891, 0
      %v932 = vsel %vm897, %v892, 0
      %v935 = vsel %vm897, %v893, 0
      %v938 = vsel %vm897, %v894, 0
      %v941 = vsel %vm897, %v895, 0
      %v944 = vsel %vm897, %v896, 0
      %946 = vmatpush.msra.mxu0 0.0
      %947 = vmatpush.msra.mxu0 0.0
      %948 = vmatpush.msra.mxu0 0.0
      %949 = vmatpush.msra.mxu0 0.0
      %950 = vmatpush.msra.mxu0 0.0
      %951 = vmatpush.msra.mxu0 0.0
      %952 = vmatpush.msra.mxu0 0.0
      %953 = vmatpush.msra.mxu0 0.0
      %954 = vmatpush.msra.mxu0 %v920
      %955 = vmatpush.msra.mxu0 %v918
      %956 = vmatpush.msra.mxu0 %v916
      %957 = vmatpush.msra.mxu0 %v914
      %958 = vmatpush.msra.mxu0 %v912
      %959 = vmatpush.msra.mxu0 %v910
      %960 = vmatpush.msra.mxu0 %v908
      %961 = vmatpush.msra.mxu0 %v906
      %962 = vmatmul.f32.gmra.mxu0 %v923
      %v963 = vpop.f32.mrf.mxu0
      %v964 = vadd.f32 0.0, %v963
      %965 = vmatmul.f32.gmra.mxu0 %v926
      %v966 = vpop.f32.mrf.mxu0
      %v967 = vadd.f32 0.0, %v966
      %968 = vmatmul.f32.gmra.mxu0 %v929
      %v969 = vpop.f32.mrf.mxu0
      %v970 = vadd.f32 0.0, %v969
      %971 = vmatmul.f32.gmra.mxu0 %v932
      %v972 = vpop.f32.mrf.mxu0
      %v973 = vadd.f32 0.0, %v972
      %974 = vmatmul.f32.gmra.mxu0 %v935
      %v975 = vpop.f32.mrf.mxu0
      %v976 = vadd.f32 0.0, %v975
      %977 = vmatmul.f32.gmra.mxu0 %v938
      %v978 = vpop.f32.mrf.mxu0
      %v979 = vadd.f32 0.0, %v978
      %980 = vmatmul.f32.gmra.mxu0 %v941
      %v981 = vpop.f32.mrf.mxu0
      %v982 = vadd.f32 0.0, %v981
      %983 = vmatmul.f32.gmra.mxu0 %v944
      %v984 = vpop.f32.mrf.mxu0
      %v985 = vadd.f32 0.0, %v984
      %986 = vdwg.mxu0
      %987 = vmatpush.msra.mxu0 0.0
      %988 = vmatpush.msra.mxu0 0.0
      %989 = vmatpush.msra.mxu0 0.0
      %990 = vmatpush.msra.mxu0 0.0
      %991 = vmatpush.msra.mxu0 0.0
      %992 = vmatpush.msra.mxu0 0.0
      %993 = vmatpush.msra.mxu0 0.0
      %994 = vmatpush.msra.mxu0 0.0
      %995 = vmatpush.msra.mxu0 %v921
      %996 = vmatpush.msra.mxu0 %v919
      %997 = vmatpush.msra.mxu0 %v917
      %998 = vmatpush.msra.mxu0 %v915
      %999 = vmatpush.msra.mxu0 %v913
      %1000 = vmatpush.msra.mxu0 %v911
      %1001 = vmatpush.msra.mxu0 %v909
      %1002 = vmatpush.msra.mxu0 %v907
      %1003 = vmatmul.f32.gmra.mxu0 %v923
      %v1004 = vpop.f32.mrf.mxu0
      %v1005 = vadd.f32 0.0, %v1004
      %1006 = vmatmul.f32.gmra.mxu0 %v926
      %v1007 = vpop.f32.mrf.mxu0
      %v1008 = vadd.f32 0.0, %v1007
      %1009 = vmatmul.f32.gmra.mxu0 %v929
      %v1010 = vpop.f32.mrf.mxu0
      %v1011 = vadd.f32 0.0, %v1010
      %1012 = vmatmul.f32.gmra.mxu0 %v932
      %v1013 = vpop.f32.mrf.mxu0
      %v1014 = vadd.f32 0.0, %v1013
      %1015 = vmatmul.f32.gmra.mxu0 %v935
      %v1016 = vpop.f32.mrf.mxu0
      %v1017 = vadd.f32 0.0, %v1016
      %1018 = vmatmul.f32.gmra.mxu0 %v938
      %v1019 = vpop.f32.mrf.mxu0
      %v1020 = vadd.f32 0.0, %v1019
      %1021 = vmatmul.f32.gmra.mxu0 %v941
      %v1022 = vpop.f32.mrf.mxu0
      %v1023 = vadd.f32 0.0, %v1022
      %1024 = vmatmul.f32.gmra.mxu0 %v944
      %v1025 = vpop.f32.mrf.mxu0
      %v1026 = vadd.f32 0.0, %v1025
      %1027 = vdwg.mxu0
      %v1028 = vld [vmem:[%s3] sm:$0xff]
      %v1029 = vld [vmem:[%s3 + $0x8] sm:$0xff]
      %v1030 = vld [vmem:[%s3 + $0x10] sm:$0xff]
      %v1031 = vld [vmem:[%s3 + $0x18] sm:$0xff]
      %v1032 = vld [vmem:[%s3 + $0x20] sm:$0xff]
      %v1033 = vld [vmem:[%s3 + $0x28] sm:$0xff]
      %v1034 = vld [vmem:[%s3 + $0x30] sm:$0xff]
      %v1035 = vld [vmem:[%s3 + $0x38] sm:$0xff]
      %v1036 = vld [vmem:[%s4] sm:$0xff]
      %v1037 = vld [vmem:[%s4 + $0x8] sm:$0xff]
      %v1038 = vld [vmem:[%s4 + $0x10] sm:$0xff]
      %v1039 = vld [vmem:[%s4 + $0x18] sm:$0xff]
      %v1040 = vld [vmem:[%s4 + $0x20] sm:$0xff]
      %v1041 = vld [vmem:[%s4 + $0x28] sm:$0xff]
      %v1042 = vld [vmem:[%s4 + $0x30] sm:$0xff]
      %v1043 = vld [vmem:[%s4 + $0x38] sm:$0xff]
      %1045 = vset.pattern.permute.xlu0 0
      %1046 = vperm.xlu0 %1045, %v1036
      %v1047 = vpop.permute.xlu0 %1046
      %1050 = vset.pattern.permute.xlu0 0
      %1051 = vperm.xlu0 %1050, %v1037
      %v1052 = vpop.permute.xlu0 %1051
      %1055 = vset.pattern.permute.xlu0 0
      %1056 = vperm.xlu0 %1055, %v1038
      %v1057 = vpop.permute.xlu0 %1056
      %1060 = vset.pattern.permute.xlu0 0
      %1061 = vperm.xlu0 %1060, %v1039
      %v1062 = vpop.permute.xlu0 %1061
      %1065 = vset.pattern.permute.xlu0 0
      %1066 = vperm.xlu0 %1065, %v1040
      %v1067 = vpop.permute.xlu0 %1066
      %1070 = vset.pattern.permute.xlu0 0
      %1071 = vperm.xlu0 %1070, %v1041
      %v1072 = vpop.permute.xlu0 %1071
      %1075 = vset.pattern.permute.xlu0 0
      %1076 = vperm.xlu0 %1075, %v1042
      %v1077 = vpop.permute.xlu0 %1076
      %1080 = vset.pattern.permute.xlu0 0
      %1081 = vperm.xlu0 %1080, %v1043
      %v1082 = vpop.permute.xlu0 %1081
      %v1085 = vsel %vm897, %v1028, 0
      %v1088 = vsel %vm897, %v1029, 0
      %v1091 = vsel %vm897, %v1030, 0
      %v1094 = vsel %vm897, %v1031, 0
      %v1097 = vsel %vm897, %v1032, 0
      %v1100 = vsel %vm897, %v1033, 0
      %v1103 = vsel %vm897, %v1034, 0
      %v1106 = vsel %vm897, %v1035, 0
      %1108 = vmatpush.msra.mxu0 0.0
      %1109 = vmatpush.msra.mxu0 0.0
      %1110 = vmatpush.msra.mxu0 0.0
      %1111 = vmatpush.msra.mxu0 0.0
      %1112 = vmatpush.msra.mxu0 0.0
      %1113 = vmatpush.msra.mxu0 0.0
      %1114 = vmatpush.msra.mxu0 0.0
      %1115 = vmatpush.msra.mxu0 0.0
      %1116 = vmatpush.msra.mxu0 %v520
      %1117 = vmatpush.msra.mxu0 %v518
      %1118 = vmatpush.msra.mxu0 %v516
      %1119 = vmatpush.msra.mxu0 %v514
      %1120 = vmatpush.msra.mxu0 %v512
      %1121 = vmatpush.msra.mxu0 %v510
      %1122 = vmatpush.msra.mxu0 %v508
      %1123 = vmatpush.msra.mxu0 %v506
      %1124 = vmatmul.f32.gmra.mxu0 %v1085
      %v1125 = vpop.f32.mrf.mxu0
      %v1126 = vadd.f32 %v1047, %v1125
      %1127 = vmatmul.f32.gmra.mxu0 %v1088
      %v1128 = vpop.f32.mrf.mxu0
      %v1129 = vadd.f32 %v1052, %v1128
      %1130 = vmatmul.f32.gmra.mxu0 %v1091
      %v1131 = vpop.f32.mrf.mxu0
      %v1132 = vadd.f32 %v1057, %v1131
      %1133 = vmatmul.f32.gmra.mxu0 %v1094
      %v1134 = vpop.f32.mrf.mxu0
      %v1135 = vadd.f32 %v1062, %v1134
      %1136 = vmatmul.f32.gmra.mxu0 %v1097
      %v1137 = vpop.f32.mrf.mxu0
      %v1138 = vadd.f32 %v1067, %v1137
      %1139 = vmatmul.f32.gmra.mxu0 %v1100
      %v1140 = vpop.f32.mrf.mxu0
      %v1141 = vadd.f32 %v1072, %v1140
      %1142 = vmatmul.f32.gmra.mxu0 %v1103
      %v1143 = vpop.f32.mrf.mxu0
      %v1144 = vadd.f32 %v1077, %v1143
      %1145 = vmatmul.f32.gmra.mxu0 %v1106
      %v1146 = vpop.f32.mrf.mxu0
      %v1147 = vadd.f32 %v1082, %v1146
      %1148 = vdwg.mxu0
      %1149 = vmatpush.msra.mxu0 0.0
      %1150 = vmatpush.msra.mxu0 0.0
      %1151 = vmatpush.msra.mxu0 0.0
      %1152 = vmatpush.msra.mxu0 0.0
      %1153 = vmatpush.msra.mxu0 0.0
      %1154 = vmatpush.msra.mxu0 0.0
      %1155 = vmatpush.msra.mxu0 0.0
      %1156 = vmatpush.msra.mxu0 0.0
      %1157 = vmatpush.msra.mxu0 %v521
      %1158 = vmatpush.msra.mxu0 %v519
      %1159 = vmatpush.msra.mxu0 %v517
      %1160 = vmatpush.msra.mxu0 %v515
      %1161 = vmatpush.msra.mxu0 %v513
      %1162 = vmatpush.msra.mxu0 %v511
      %1163 = vmatpush.msra.mxu0 %v509
      %1164 = vmatpush.msra.mxu0 %v507
      %1165 = vmatmul.f32.gmra.mxu0 %v1085
      %v1166 = vpop.f32.mrf.mxu0
      %v1167 = vadd.f32 %v1047, %v1166
      %1168 = vmatmul.f32.gmra.mxu0 %v1088
      %v1169 = vpop.f32.mrf.mxu0
      %v1170 = vadd.f32 %v1052, %v1169
      %1171 = vmatmul.f32.gmra.mxu0 %v1091
      %v1172 = vpop.f32.mrf.mxu0
      %v1173 = vadd.f32 %v1057, %v1172
      %1174 = vmatmul.f32.gmra.mxu0 %v1094
      %v1175 = vpop.f32.mrf.mxu0
      %v1176 = vadd.f32 %v1062, %v1175
      %1177 = vmatmul.f32.gmra.mxu0 %v1097
      %v1178 = vpop.f32.mrf.mxu0
      %v1179 = vadd.f32 %v1067, %v1178
      %1180 = vmatmul.f32.gmra.mxu0 %v1100
      %v1181 = vpop.f32.mrf.mxu0
      %v1182 = vadd.f32 %v1072, %v1181
      %1183 = vmatmul.f32.gmra.mxu0 %v1103
      %v1184 = vpop.f32.mrf.mxu0
      %v1185 = vadd.f32 %v1077, %v1184
      %1186 = vmatmul.f32.gmra.mxu0 %v1106
      %v1187 = vpop.f32.mrf.mxu0
      %v1188 = vadd.f32 %v1082, %v1187
      %1189 = vdwg.mxu0
      %v1190 = vadd.f32 %v1126, %v964
      %v1191 = vadd.f32 %v1167, %v1005
      %v1192 = vadd.f32 %v1129, %v967
      %v1193 = vadd.f32 %v1170, %v1008
      %v1194 = vadd.f32 %v1132, %v970
      %v1195 = vadd.f32 %v1173, %v1011
      %v1196 = vadd.f32 %v1135, %v973
      %v1197 = vadd.f32 %v1176, %v1014
      %v1198 = vadd.f32 %v1138, %v976
      %v1199 = vadd.f32 %v1179, %v1017
      %v1200 = vadd.f32 %v1141, %v979
      %v1201 = vadd.f32 %v1182, %v1020
      %v1202 = vadd.f32 %v1144, %v982
      %v1203 = vadd.f32 %v1185, %v1023
      %v1204 = vadd.f32 %v1147, %v985
      %v1205 = vadd.f32 %v1188, %v1026
      %1206 = vst [vmem:[%s495] sm:$0xff] %v1190
      %1207 = vst [vmem:[%s495 + $0x8] sm:$0xff] %v1191
      %1208 = vst [vmem:[%s495 + $0x10] sm:$0xff] %v1192
      %1209 = vst [vmem:[%s495 + $0x18] sm:$0xff] %v1193
      %1210 = vst [vmem:[%s495 + $0x20] sm:$0xff] %v1194
      %1211 = vst [vmem:[%s495 + $0x28] sm:$0xff] %v1195
      %1212 = vst [vmem:[%s495 + $0x30] sm:$0xff] %v1196
      %1213 = vst [vmem:[%s495 + $0x38] sm:$0xff] %v1197
      %1214 = vst [vmem:[%s495 + $0x40] sm:$0xff] %v1198
      %1215 = vst [vmem:[%s495 + $0x48] sm:$0xff] %v1199
      %1216 = vst [vmem:[%s495 + $0x50] sm:$0xff] %v1200
      %1217 = vst [vmem:[%s495 + $0x58] sm:$0xff] %v1201
      %1218 = vst [vmem:[%s495 + $0x60] sm:$0xff] %v1202
      %1219 = vst [vmem:[%s495 + $0x68] sm:$0xff] %v1203
      %1220 = vst [vmem:[%s495 + $0x70] sm:$0xff] %v1204
      %1221 = vst [vmem:[%s495 + $0x78] sm:$0xff] %v1205
      %p1222 = scmp.lt.s32.totalorder %s25, 1
      %s1223 = scalar_select %p1222, %s25, 1
      %s1224 = smul.addr %s1223, 16
      %s1225 = smul.addr %s1224, 8
      %s1226 = scalar_lea.vmem %s11, %s1225
      %p1227 = scmp.lt.s32.totalorder %s25, 1
      %s1228 = scalar_select %p1227, %s25, 1
      %s1229 = smul.addr %s1228, 8
      %s1230 = smul.addr %s1229, 8
      %s1231 = scalar_lea.vmem %s12, %s1230
      %p1232 = scmp.lt.s32.totalorder %s25, 1
      %s1233 = scalar_select %p1232, %s25, 1
      %s1234 = smul.addr %s1233, 8
      %s1235 = smul.addr %s1234, 8
      %s1236 = scalar_lea.vmem %s13, %s1235
      // Predicated region
      $region65: #{light_pan_forward.1} parent=63 // pred_check
        %p1237 = pneg %p289
      $region66: #{light_pan_forward.1} parent=63 // pred_check_branch
        %1239 = sbr.rel (%p1237) target = $region68
      $region67: #{light_pan_forward.1} parent=63 // pred_region
        _
      $region68: #{light_pan_forward.1} parent=63 // pred_fallthru
        _
      // Predicated region
      $region69: #{light_pan_forward.1} parent=63 // pred_check
        %p1240 = pneg %p315
      $region70: #{light_pan_forward.1} parent=63 // pred_check_branch
        %1242 = sbr.rel (%p1240) target = $region72
      $region71: #{light_pan_forward.1} parent=63 // pred_region
        _
      $region72: #{light_pan_forward.1} parent=63 // pred_fallthru
        _
      // Predicated region
      $region73: #{light_pan_forward.1} parent=63 // pred_check
        %p1243 = pneg %p341
      $region74: #{light_pan_forward.1} parent=63 // pred_check_branch
        %1245 = sbr.rel (%p1243) target = $region76
      $region75: #{light_pan_forward.1} parent=63 // pred_region
        _
      $region76: #{light_pan_forward.1} parent=63 // pred_fallthru
        _
    $region64: #{light_pan_forward.1} parent=5 // pred_fallthru
      _
    %p1246 = scmp.le.s32.totalorder 2, %s20
    // Predicated region
    $region77: #{light_pan_forward.1} parent=5 // pred_check
      %p1247 = pneg %p1246
    $region78: #{light_pan_forward.1} parent=5 // pred_check_branch
      %1249 = sbr.rel (%p1247) target = $region80
    $region79: #{light_pan_forward.1} parent=5 // pred_region
      %s1250 = ssub.s32 %s20, 2
      // Predicated region
      $region81: #{light_pan_forward.1} parent=79 // pred_check
        %p1251 = pneg %p295
      $region82: #{light_pan_forward.1} parent=79 // pred_check_branch
        %1253 = sbr.rel (%p1251) target = $region84
      $region83: #{light_pan_forward.1} parent=79 // pred_region
        %p1254 = scmp.lt.s32.totalorder %s26, 1
        %s1255 = scalar_select %p1254, %s26, 1
        %s1256 = smul.addr %s1255, 16
        %s1257 = smul.addr %s1256, 8
        %s1258 = scalar_lea.vmem %s11, %s1257
      $region84: #{light_pan_forward.1} parent=79 // pred_fallthru
        _
      // Predicated region
      $region85: #{light_pan_forward.1} parent=79 // pred_check
        %p1259 = pneg %p321
      $region86: #{light_pan_forward.1} parent=79 // pred_check_branch
        %1261 = sbr.rel (%p1259) target = $region88
      $region87: #{light_pan_forward.1} parent=79 // pred_region
        %p1262 = scmp.lt.s32.totalorder %s26, 1
        %s1263 = scalar_select %p1262, %s26, 1
        %s1264 = smul.addr %s1263, 8
        %s1265 = smul.addr %s1264, 8
        %s1266 = scalar_lea.vmem %s12, %s1265
      $region88: #{light_pan_forward.1} parent=79 // pred_fallthru
        _
      // Predicated region
      $region89: #{light_pan_forward.1} parent=79 // pred_check
        %p1267 = pneg %p347
      $region90: #{light_pan_forward.1} parent=79 // pred_check_branch
        %1269 = sbr.rel (%p1267) target = $region92
      $region91: #{light_pan_forward.1} parent=79 // pred_region
        %p1270 = scmp.lt.s32.totalorder %s26, 1
        %s1271 = scalar_select %p1270, %s26, 1
        %s1272 = smul.addr %s1271, 8
        %s1273 = smul.addr %s1272, 8
        %s1274 = scalar_lea.vmem %s13, %s1273
      $region92: #{light_pan_forward.1} parent=79 // pred_fallthru
        _
    $region80: #{light_pan_forward.1} parent=5 // pred_fallthru
      _
  $region6: #{light_pan_forward.1} parent=0 // loop_footer
    %s24 = sadd.s32 1, %s20
  $region7: #{light_pan_forward.1} parent=0 // loop_footer_branch
    %19 = sbr.rel target = $region3
  $region8: #{light_pan_forward.1} parent=0 // loop_exit
    _

</llo_original>
